<compile_context>
chip_gen: v7x
topology: tpu7x:2x2x1
jax: 0.10.0
libtpu: 0.0.40
codegen_flags: <defaults>
</compile_context>

<pallas_src>
import functools

import jax
import jax.numpy as jnp
from jax.experimental import pallas as pl
from jax.experimental.pallas import tpu as pltpu

EPS = 1e-5
MOMENTUM = 0.5

_TILE_TARGET_BYTES = 2 << 20   # ~2 MiB per pipelined stream buffer
_VMEM_LIMIT_BYTES = 48 << 20   # > default scoped limits, < v7x 64 MiB physical
_FUSE_LIMIT_BYTES = 10 << 20   # whole-problem budget for the fused fast path


def _round_up(x, m):
    return ((x + m - 1) // m) * m


def _cdiv(a, b):
    return -(-a // b)


# ---------------------------------------------------------------------------
# Kernels
# ---------------------------------------------------------------------------
def _vbn_fused_train_kernel(w_ref, u_ref, v_ref, uo_ref, vo_ref, var_ref, *,
                            eps):
    """Single-pass path: reduce + alpha + scale with u, v read exactly once.

    w_ref:  (1, C, 1) f32 weight.
    u_ref/v_ref:  (N, C, L) full arrays in VMEM.
    uo_ref/vo_ref: (N, C, L) outputs.  var_ref: (1, C, 1) f32 per-channel sum.
    """
    u = u_ref[...].astype(jnp.float32)
    v = v_ref[...].astype(jnp.float32)
    p2 = u * u + v * v
    s = jnp.sum(p2, axis=2, keepdims=True)       # (N, C, 1): lane reduce
    var = jnp.sum(s, axis=0, keepdims=True)      # (1, C, 1): add N planes
    var_ref[...] = var
    alpha = w_ref[...] / (jnp.sqrt(var) + eps)   # (1, C, 1) f32
    uo_ref[...] = (u * alpha).astype(uo_ref.dtype)
    vo_ref[...] = (v * alpha).astype(vo_ref.dtype)


def _vbn_reduce_kernel(u_ref, v_ref, part_ref, *, true_l, l_tile):
    """Accumulate per-row (= per (n, c)) sum of u^2 + v^2 in float32.

    u_ref/v_ref: (row_tile, l_tile) tiles of the (N*C, H*W) views.
    part_ref:    (row_tile, 1) f32 accumulator, resident across the lane axis.
    Ragged lane edges (only when the lane axis is split) are masked in-kernel;
    ragged row edges write garbage only to out-of-bounds rows, which Pallas
    drops on writeback and which the glue never reads.
    """
    j = pl.program_id(1)

    @pl.when(j == 0)
    def _():
        part_ref[...] = jnp.zeros_like(part_ref)

    u = u_ref[...].astype(jnp.float32)
    v = v_ref[...].astype(jnp.float32)
    p2 = u * u + v * v
    if true_l % l_tile != 0:
        lane = jax.lax.broadcasted_iota(jnp.int32, p2.shape, dimension=1)
        p2 = jnp.where(j * l_tile + lane < true_l, p2, 0.0)
    part_ref[...] += jnp.sum(p2, axis=1, keepdims=True)


def _vbn_scale_kernel(a_ref, u_ref, v_ref, uo_ref, vo_ref):
    """Elementwise scale: per-row alpha (row_tile, 1) broadcast over lanes.

    Scales in the native input dtype (bf16 stays bf16, f32 stays f32).
    Out-of-bounds lanes/rows of ragged edge blocks produce garbage that Pallas
    drops on writeback, so no padding / slicing is needed anywhere.
    """
    a = a_ref[...].astype(u_ref.dtype)
    uo_ref[...] = u_ref[...] * a
    vo_ref[...] = v_ref[...] * a


# ---------------------------------------------------------------------------
# Tiling
# ---------------------------------------------------------------------------
def _choose_tiles(M, L, lane_tile=None):
    """Pick (row_tile, l_tile, nr, nl) with NO padded traffic.

    Lane axis: prefer a single full-extent lane block (legal under the (8,128)
    rule, no masking needed); only split lanes for very large spatial extents,
    using a near-divisor multiple of 128 so ragged waste stays tiny.
    Row axis: multiples of 8 (or the full extent when M < 8), sized to the
    per-stream tile budget, with >= 2 row tiles when possible (v7x megacore).
    """
    if lane_tile is not None:
        l_tile = lane_tile
        if l_tile < L:
            l_tile = _round_up(l_tile, 128)
        if l_tile >= L:
            l_tile = L
    elif 8 * L * 4 <= 4 * _TILE_TARGET_BYTES:
        l_tile = L
    else:
        n_chunks = _cdiv(L, 8 * 1024)
        l_tile = _round_up(_cdiv(L, n_chunks), 128)
    nl = _cdiv(L, l_tile)

    if M < 8:
        row_tile = M
    else:
        t = max(8, _TILE_TARGET_BYTES // max(l_tile * 4, 1))
        row_tile = max(8, (min(t, M) // 8) * 8)
        if M >= 16 and _cdiv(M, row_tile) < 2:
            row_tile = max(8, (_cdiv(row_tile, 2) // 8) * 8)
    nr = _cdiv(M, row_tile)
    return row_tile, l_tile, nr, nl


# ---------------------------------------------------------------------------
# Wrapper
# ---------------------------------------------------------------------------
def vector_batch_norm(u, v, weight, running_var, training=True,
                      eps=EPS, momentum=MOMENTUM,
                      force_path=None, lane_tile=None):
    """u, v: (N, C, H, W). weight, running_var: (1, C, 1, 1).

    Returns ((u_out, v_out), new_running_var), u_out/v_out in NCHW.
    `force_path` in {None, "fused", "tiled"} and `lane_tile` are test knobs.
    """
    N, C, H, W = u.shape
    M, L = N * C, H * W
    w_c = weight.reshape(1, C).astype(jnp.float32)

    itemsize = max(u.dtype.itemsize, v.dtype.itemsize)
    fused_bytes = M * L * (4 * itemsize + 12)       # streams + f32 temporaries
    use_fused = training and (
        force_path == "fused"
        or (force_path is None and fused_bytes <= _FUSE_LIMIT_BYTES))

    if use_fused:
        # --- fused small-tensor path: one kernel, 2 reads + 2 writes ---
        u3 = u.reshape(N, C, L)
        v3 = v.reshape(N, C, L)
        w3 = w_c.reshape(1, C, 1)
        uo3, vo3, var3 = pl.pallas_call(
            functools.partial(_vbn_fused_train_kernel, eps=eps),
            out_shape=(jax.ShapeDtypeStruct((N, C, L), u.dtype),
                       jax.ShapeDtypeStruct((N, C, L), v.dtype),
                       jax.ShapeDtypeStruct((1, C, 1), jnp.float32)),
            compiler_params=pltpu.CompilerParams(
                vmem_limit_bytes=_VMEM_LIMIT_BYTES),
        )(w3, u3, v3)
        var_c = var3.reshape(1, C)
        new_running_var = (
            running_var * (1.0 - momentum)
            + momentum * var_c.reshape(1, C, 1, 1).astype(running_var.dtype))
        return (uo3.reshape(N, C, H, W), vo3.reshape(N, C, H, W)), new_running_var

    # --- tiled path: pure reshape views, no padding, no slicing ---
    u2 = u.reshape(M, L)
    v2 = v.reshape(M, L)
    row_tile, l_tile, nr, nl = _choose_tiles(M, L, lane_tile)
    grid = (nr, nl)
    data_spec = pl.BlockSpec((row_tile, l_tile), lambda i, j: (i, j))
    col_spec = pl.BlockSpec((row_tile, 1), lambda i, j: (i, 0))

    if training:
        # Pass 1: per-row f32 sums of u^2 + v^2.
        partials = pl.pallas_call(
            functools.partial(_vbn_reduce_kernel, true_l=L, l_tile=l_tile),
            out_shape=jax.ShapeDtypeStruct((M, 1), jnp.float32),
            grid=grid,
            in_specs=[data_spec, data_spec],
            out_specs=col_spec,
            compiler_params=pltpu.CompilerParams(
                dimension_semantics=("parallel", "arbitrary"),
                vmem_limit_bytes=_VMEM_LIMIT_BYTES),
        )(u2, v2)

        # Tiny O(N*C) glue: per-channel combine, alpha, running_var EMA.
        var_c = jnp.sum(partials.reshape(N, C), axis=0, keepdims=True)  # (1,C)
        std_c = jnp.sqrt(var_c)
        alpha_c = w_c / (std_c + eps)
        new_running_var = (
            running_var * (1.0 - momentum)
            + momentum * var_c.reshape(1, C, 1, 1).astype(running_var.dtype))
    else:
        rv_c = running_var.reshape(1, C).astype(jnp.float32)
        alpha_c = w_c / jnp.sqrt(rv_c + eps)
        new_running_var = running_var

    # Per-row alpha column (row r -> channel r % C).  Tiny (N*C floats).
    alpha_rows = jnp.broadcast_to(alpha_c, (N, C)).reshape(M, 1)

    # Pass 2: lane-dense elementwise scale, fully parallel tiles.
    uo2, vo2 = pl.pallas_call(
        _vbn_scale_kernel,
        out_shape=(jax.ShapeDtypeStruct((M, L), u.dtype),
                   jax.ShapeDtypeStruct((M, L), v.dtype)),
        grid=grid,
        in_specs=[col_spec, data_spec, data_spec],
        out_specs=(data_spec, data_spec),
        compiler_params=pltpu.CompilerParams(
            dimension_semantics=("parallel", "parallel"),
            vmem_limit_bytes=_VMEM_LIMIT_BYTES),
    )(alpha_rows, u2, v2)

    return (uo2.reshape(N, C, H, W), vo2.reshape(N, C, H, W)), new_running_var


# ---------------------------------------------------------------------------
# Reference + tests
# ---------------------------------------------------------------------------
def _reference(u, v, weight, running_var, training):
    if training:
        var = jnp.sum(u * u + v * v, axis=(0, 2, 3), keepdims=True)
        std = jnp.sqrt(var)
        alpha = weight / (std + EPS)
        new_rv = running_var * (1.0 - MOMENTUM) + MOMENTUM * var
    else:
        alpha = weight / jnp.sqrt(running_var + EPS)
        new_rv = running_var
    return (u * alpha, v * alpha), new_rv


def _check(name, got, want, rtol=1e-5, atol=1e-5):
    (gu, gv), grv = got
    (wu, wv), wrv = want
    assert jnp.allclose(gu, wu, rtol=rtol, atol=atol), f"{name}: u mismatch"
    assert jnp.allclose(gv, wv, rtol=rtol, atol=atol), f"{name}: v mismatch"
    assert jnp.allclose(grv, wrv, rtol=rtol, atol=atol), f"{name}: rv mismatch"


if __name__ == "__main__":
    key = jax.random.PRNGKey(0)

    # --- Test 1: small shape -> fused path (training) + tiled eval ----------
    k_u, k_v, k_w, key = jax.random.split(key, 4)
    N, C, H, W = 2, 4, 16, 16
    u = jax.random.normal(k_u, (N, C, H, W), dtype=jnp.float32)
    v = jax.random.normal(k_v, (N, C, H, W), dtype=jnp.float32)
    weight = jax.random.uniform(k_w, (1, C, 1, 1), dtype=jnp.float32)
    running_var = jnp.ones((1, C, 1, 1), dtype=jnp.float32)

    out = vector_batch_norm(u, v, weight, running_var, training=True)
    jax.block_until_ready(out[0])
    _check("fused-train", out, _reference(u, v, weight, running_var, True))
    new_rv = out[1]

    out_e = vector_batch_norm(u, v, weight, new_rv, training=False)
    jax.block_until_ready(out_e[0])
    _check("tiled-eval", out_e, _reference(u, v, weight, new_rv, False))

    # --- Test 2: ragged rows & lanes, forced tiled path (full-L lane block) -
    k_u, k_v, k_w, key = jax.random.split(key, 4)
    N, C, H, W = 3, 5, 13, 13          # M = 15 (not % 8), L = 169 (not % 128)
    u = jax.random.normal(k_u, (N, C, H, W), dtype=jnp.float32)
    v = jax.random.normal(k_v, (N, C, H, W), dtype=jnp.float32)
    weight = jax.random.uniform(k_w, (1, C, 1, 1), dtype=jnp.float32)
    running_var = jnp.ones((1, C, 1, 1), dtype=jnp.float32)

    out = vector_batch_norm(u, v, weight, running_var, training=True,
                            force_path="tiled")
    jax.block_until_ready(out[0])
    _check("tiled-train", out, _reference(u, v, weight, running_var, True))

    # --- Test 3: forced lane split -> in-kernel ragged-edge masking ---------
    k_u, k_v, k_w, key = jax.random.split(key, 4)
    N, C, H, W = 2, 8, 13, 13          # M = 16, L = 169, lane tile 128 -> nl=2
    u = jax.random.normal(k_u, (N, C, H, W), dtype=jnp.float32)
    v = jax.random.normal(k_v, (N, C, H, W), dtype=jnp.float32)
    weight = jax.random.uniform(k_w, (1, C, 1, 1), dtype=jnp.float32)
    running_var = jnp.ones((1, C, 1, 1), dtype=jnp.float32)

    out = vector_batch_norm(u, v, weight, running_var, training=True,
                            force_path="tiled", lane_tile=128)
    jax.block_until_ready(out[0])
    _check("tiled-masked-train", out,
           _reference(u, v, weight, running_var, True))

    print("KERNEL_OK")
</pallas_src>

<mosaic_0001>
module attributes {stable_mosaic.version = 11 : i64} {
  func.func @_vbn_fused_train_kernel(%arg0: memref<1x4x1xf32, #tpu.memory_space<vmem>>, %arg1: memref<2x4x256xf32, #tpu.memory_space<vmem>>, %arg2: memref<2x4x256xf32, #tpu.memory_space<vmem>>, %arg3: memref<2x4x256xf32, #tpu.memory_space<vmem>>, %arg4: memref<2x4x256xf32, #tpu.memory_space<vmem>>, %arg5: memref<1x4x1xf32, #tpu.memory_space<vmem>>) attributes {dimension_semantics = [], scalar_prefetch = 0 : i64, scratch_operands = 0 : i64, tpu.core_type = #tpu.core_type<tc>} {
    %c0 = arith.constant 0 : index
    %c0_0 = arith.constant 0 : index
    %c0_1 = arith.constant 0 : index
    %0 = vector.load %arg1[%c0, %c0_0, %c0_1] : memref<2x4x256xf32, #tpu.memory_space<vmem>>, vector<2x4x256xf32>
    %c0_2 = arith.constant 0 : index
    %c0_3 = arith.constant 0 : index
    %c0_4 = arith.constant 0 : index
    %1 = vector.load %arg2[%c0_2, %c0_3, %c0_4] : memref<2x4x256xf32, #tpu.memory_space<vmem>>, vector<2x4x256xf32>
    %2 = arith.mulf %0, %0 : vector<2x4x256xf32>
    %3 = arith.mulf %1, %1 : vector<2x4x256xf32>
    %4 = arith.addf %2, %3 : vector<2x4x256xf32>
    %cst = arith.constant dense<0.000000e+00> : vector<2x4xf32>
    %5 = vector.multi_reduction <add>, %4, %cst [2] : vector<2x4x256xf32> to vector<2x4xf32>
    %6 = vector.shape_cast %5 : vector<2x4xf32> to vector<2x4x1xf32>
    %cst_5 = arith.constant dense<0.000000e+00> : vector<4x1xf32>
    %7 = vector.multi_reduction <add>, %6, %cst_5 [0] : vector<2x4x1xf32> to vector<4x1xf32>
    %8 = vector.shape_cast %7 : vector<4x1xf32> to vector<1x4x1xf32>
    %c0_6 = arith.constant 0 : index
    %c0_7 = arith.constant 0 : index
    %c0_8 = arith.constant 0 : index
    %9 = vector.load %arg5[%c0_6, %c0_7, %c0_8] : memref<1x4x1xf32, #tpu.memory_space<vmem>>, vector<1x4x1xf32>
    tpu.vector_store %arg5[%c0_6, %c0_7, %c0_8], %8 {strides = array<i32>} : memref<1x4x1xf32, #tpu.memory_space<vmem>>, vector<1x4x1xf32>,
    %c0_9 = arith.constant 0 : index
    %c0_10 = arith.constant 0 : index
    %c0_11 = arith.constant 0 : index
    %10 = vector.load %arg0[%c0_9, %c0_10, %c0_11] : memref<1x4x1xf32, #tpu.memory_space<vmem>>, vector<1x4x1xf32>
    %11 = math.sqrt %8 : vector<1x4x1xf32>
    %cst_12 = arith.constant 9.99999974E-6 : f32
    %12 = vector.broadcast %cst_12 : f32 to vector<1x4x1xf32>
    %13 = arith.addf %11, %12 : vector<1x4x1xf32>
    %14 = arith.divf %10, %13 : vector<1x4x1xf32>
    %15 = vector.broadcast %14 : vector<1x4x1xf32> to vector<2x4x256xf32>
    %16 = arith.mulf %0, %15 : vector<2x4x256xf32>
    %c0_13 = arith.constant 0 : index
    %c0_14 = arith.constant 0 : index
    %c0_15 = arith.constant 0 : index
    %17 = vector.load %arg3[%c0_13, %c0_14, %c0_15] : memref<2x4x256xf32, #tpu.memory_space<vmem>>, vector<2x4x256xf32>
    tpu.vector_store %arg3[%c0_13, %c0_14, %c0_15], %16 {strides = array<i32>} : memref<2x4x256xf32, #tpu.memory_space<vmem>>, vector<2x4x256xf32>,
    %18 = vector.broadcast %14 : vector<1x4x1xf32> to vector<2x4x256xf32>
    %19 = arith.mulf %1, %18 : vector<2x4x256xf32>
    %c0_16 = arith.constant 0 : index
    %c0_17 = arith.constant 0 : index
    %c0_18 = arith.constant 0 : index
    %20 = vector.load %arg4[%c0_16, %c0_17, %c0_18] : memref<2x4x256xf32, #tpu.memory_space<vmem>>, vector<2x4x256xf32>
    tpu.vector_store %arg4[%c0_16, %c0_17, %c0_18], %19 {strides = array<i32>} : memref<2x4x256xf32, #tpu.memory_space<vmem>>, vector<2x4x256xf32>,
    return
  }
}

</mosaic_0001>

<llo_original>
// kernel: tpu_custom_call.1
$region0: #{tpu_custom_call.1}
  #allocation0 [shape = 'u32[]', space=smem, size = 0x4, offset = 0x4, fixed_abs, tag = 'smem constant byte address 0x4 - core index']
  #allocation1 [shape = 'u32[144,128]{1,0:T(1,128)}', space=vmem, size = 0x12000, scoped, tag = 'internal scratch']
  %s0 = inlined_call_operand.vmem [shape: f32[1,4,1], index: 0, kind: input, shape index: {}]
  %s1 = inlined_call_operand.hbm [shape: f32[2,4,256], index: 1, kind: input, shape index: {}]
  %s2 = inlined_call_operand.hbm [shape: f32[2,4,256], index: 2, kind: input, shape index: {}]
  %s3 = inlined_call_operand.hbm [shape: f32[2,4,256], index: 3, kind: output, shape index: {0}]
  %s4 = inlined_call_operand.hbm [shape: f32[2,4,256], index: 4, kind: output, shape index: {1}]
  %s5 = inlined_call_operand.vmem [shape: f32[1,4,1], index: 5, kind: output, shape index: {2}]
  %6 = xla_tuple %s3, %s4, %s5
  %s7 = sld [smem:[#allocation0]]
  $region46: #{tpu_custom_call.1} parent=0
    _
  %s9 = ssub.s32 1, %s7
  %s10 = scalar_select 0, %s9, %s7
  $region1: #{tpu_custom_call.1} parent=0
    #allocation2 [shape = 'u8[8192]{0}', space=vmem, size = 0x2000, scoped, tag = 'input window, operand 1, single buffered']
    #allocation3 [shape = 's32[1]{0}', space=sflag, size = 0x4, scoped, tag = 'scoped memory for tpu_custom_call.1']
    #allocation4 [shape = 's32[1]{0}', space=sflag, size = 0x4, scoped, tag = 'scoped memory for tpu_custom_call.1']
    #allocation5 [shape = 'u8[8192]{0}', space=vmem, size = 0x2000, scoped, tag = 'input window, operand 2, single buffered']
    #allocation6 [shape = 's32[1]{0}', space=sflag, size = 0x4, scoped, tag = 'scoped memory for tpu_custom_call.1']
    #allocation7 [shape = 'u8[8192]{0}', space=vmem, size = 0x2000, scoped, tag = 'output window, operand 0, single buffered']
    #allocation8 [shape = 'u8[8192]{0}', space=vmem, size = 0x2000, scoped, tag = 'output window, operand 1, single buffered']
    #allocation9 [shape = 's32[1]{0}', space=sflag, size = 0x4, scoped, tag = 'scoped memory for tpu_custom_call.1']
    %11 = vsyncpa [#allocation3], 0
    %12 = vsyncpa [#allocation6], 0
    %13 = vsyncpa [#allocation4], 0
    %14 = vsyncpa [#allocation9], 0
    // Predicated region
    $region2: #{tpu_custom_call.1} parent=1 // pred_check
      _
    $region3: #{tpu_custom_call.1} parent=1 // pred_check_branch
      %16 = sbr.rel (0) target = $region5
    $region4: #{tpu_custom_call.1} parent=1 // pred_region
      _
    $region5: #{tpu_custom_call.1} parent=1 // pred_fallthru
      _
    // Predicated region
    $region6: #{tpu_custom_call.1} parent=1 // pred_check
      _
    $region7: #{tpu_custom_call.1} parent=1 // pred_check_branch
      %18 = sbr.rel (0) target = $region9
    $region8: #{tpu_custom_call.1} parent=1 // pred_region
      %s20 = ssub.s32 256, 256
      %21 = vsyncadd [#allocation3], %s20
      %s22 = sshll.u32 [#allocation2], 4
      %s23 = int_to_ptr.vmem [resolvable:$true] %s22
      %28 = dma.hbm_to_vmem [thread:$0]  %s1, 256, %s23, [#allocation3], 128, 128, 8
    $region9: #{tpu_custom_call.1} parent=1 // pred_fallthru
      _
    // Predicated region
    $region10: #{tpu_custom_call.1} parent=1 // pred_check
      _
    $region11: #{tpu_custom_call.1} parent=1 // pred_check_branch
      %30 = sbr.rel (0) target = $region13
    $region12: #{tpu_custom_call.1} parent=1 // pred_region
      %s32 = ssub.s32 256, 256
      %33 = vsyncadd [#allocation6], %s32
      %s34 = sshll.u32 [#allocation5], 4
      %s35 = int_to_ptr.vmem [resolvable:$true] %s34
      %40 = dma.hbm_to_vmem [thread:$0]  %s2, 256, %s35, [#allocation6], 128, 128, 8
    $region13: #{tpu_custom_call.1} parent=1 // pred_fallthru
      _
    // Predicated region
    $region14: #{tpu_custom_call.1} parent=1 // pred_check
      _
    $region15: #{tpu_custom_call.1} parent=1 // pred_check_branch
      %42 = sbr.rel (0) target = $region17
    $region16: #{tpu_custom_call.1} parent=1 // pred_region
      %43 = dma.done [#allocation3], 256
    $region17: #{tpu_custom_call.1} parent=1 // pred_fallthru
      _
    // Predicated region
    $region18: #{tpu_custom_call.1} parent=1 // pred_check
      _
    $region19: #{tpu_custom_call.1} parent=1 // pred_check_branch
      %45 = sbr.rel (0) target = $region21
    $region20: #{tpu_custom_call.1} parent=1 // pred_region
      %46 = dma.done [#allocation6], 256
    $region21: #{tpu_custom_call.1} parent=1 // pred_fallthru
      _
    %v47 = vld [vmem:[#allocation2] sm:$0xff]
    %v48 = vld [vmem:[#allocation2 + $0x8] sm:$0xff]
    %v49 = vld [vmem:[#allocation5] sm:$0xff]
    %v50 = vld [vmem:[#allocation5 + $0x8] sm:$0xff]
    %v51 = vmul.f32 %v47, %v47
    %v52 = vmul.f32 %v48, %v48
    %v53 = vmul.f32 %v49, %v49
    %v54 = vmul.f32 %v50, %v50
    %v55 = vadd.f32 %v51, %v53
    %v56 = vadd.f32 %v52, %v54
    %v59 = vcombine.high %v55, %v55
    %v60 = vcombine.high %v56, %v56
    %vm63 = vcmask 1043456
    %v64 = vsel %vm63, %v55, 0.0
    %v65 = vsel %vm63, %v59, 0.0
    %v66 = vadd.f32 %v64, %v65
    %67 = vadd.xlane.f32.xlu0 %v66
    %v68 = vpop.xlane.xlu0 %67
    %v69 = vsel %vm63, %v56, 0.0
    %v70 = vsel %vm63, %v60, 0.0
    %v71 = vadd.f32 %v69, %v70
    %72 = vadd.xlane.f32.xlu0 %v71
    %v73 = vpop.xlane.xlu0 %72
    %v74 = vsel %vm63, %v68, 0.0
    %v75 = vsel %vm63, %v73, 0.0
    %v76 = vadd.f32 %v74, %v75
    %vm77 = vcmask 3072
    %78 = vst.msk [vmem:[%s5] sm:$0xf] %vm77, %v76
    %v79 = vld [vmem:[%s0] sm:$0xf]
    %v80 = vrsqrt.pop %v76
    %v81 = vmul.f32 %v76, %v80
    %vm82 = vcmp.eq.f32.partialorder %v76, inf
    %v83 = vsel %vm82, %v76, %v81
    %vm84 = vcmp.eq.f32.partialorder %v76, 0.0
    %v85 = vand.u32 %v76, 2147483648
    %v86 = vsel %vm84, %v85, %v83
    %v87 = vadd.f32 %v86, 1e-05
    %v88 = vrcp.pop %v87
    %v89 = vmul.f32 %v79, %v88
    %91 = vset.pattern.permute.xlu0 0
    %92 = vperm.xlu0 %91, %v89
    %v93 = vpop.permute.xlu0 %92
    %v95 = vunpack.c.l.s4 839922192
    %v96 = vunpack.c.0.s8 %v95
    %v97 = vlaneseq
    %v98 = vshrl.u32 %v97, 7
    %v99 = vsub.s32 %v96, %v98
    %v100 = vrot.slane %v93, %v99
    %v102 = vmul.f32 %v47, %v100
    %v103 = vmul.f32 %v48, %v100
    %104 = vst [vmem:[#allocation7] sm:$0xff] %v102
    %105 = vst [vmem:[#allocation7 + $0x8] sm:$0xff] %v103
    %v106 = vmul.f32 %v49, %v100
    %v107 = vmul.f32 %v50, %v100
    %108 = vst [vmem:[#allocation8] sm:$0xff] %v106
    %109 = vst [vmem:[#allocation8 + $0x8] sm:$0xff] %v107
    // Predicated region
    $region22: #{tpu_custom_call.1} parent=1 // pred_check
      _
    $region23: #{tpu_custom_call.1} parent=1 // pred_check_branch
      %111 = sbr.rel (0) target = $region25
    $region24: #{tpu_custom_call.1} parent=1 // pred_region
      %s113 = ssub.s32 256, 256
      %114 = vsyncadd [#allocation4], %s113
      %s115 = sshll.u32 [#allocation7], 4
      %s116 = int_to_ptr.vmem [resolvable:$true] %s115
      %121 = dma.vmem_to_hbm [thread:$0]  %s116, 256, %s3, [#allocation4], 128, 128, 8
    $region25: #{tpu_custom_call.1} parent=1 // pred_fallthru
      _
    // Predicated region
    $region26: #{tpu_custom_call.1} parent=1 // pred_check
      _
    $region27: #{tpu_custom_call.1} parent=1 // pred_check_branch
      %123 = sbr.rel (0) target = $region29
    $region28: #{tpu_custom_call.1} parent=1 // pred_region
      %s125 = ssub.s32 256, 256
      %126 = vsyncadd [#allocation9], %s125
      %s127 = sshll.u32 [#allocation8], 4
      %s128 = int_to_ptr.vmem [resolvable:$true] %s127
      %133 = dma.vmem_to_hbm [thread:$0]  %s128, 256, %s4, [#allocation9], 128, 128, 8
    $region29: #{tpu_custom_call.1} parent=1 // pred_fallthru
      _
    // Predicated region
    $region30: #{tpu_custom_call.1} parent=1 // pred_check
      _
    $region31: #{tpu_custom_call.1} parent=1 // pred_check_branch
      %135 = sbr.rel (0) target = $region33
    $region32: #{tpu_custom_call.1} parent=1 // pred_region
      _
    $region33: #{tpu_custom_call.1} parent=1 // pred_fallthru
      _
    // Predicated region
    $region34: #{tpu_custom_call.1} parent=1 // pred_check
      _
    $region35: #{tpu_custom_call.1} parent=1 // pred_check_branch
      %137 = sbr.rel (0) target = $region37
    $region36: #{tpu_custom_call.1} parent=1 // pred_region
      %138 = dma.done [#allocation4], 256
    $region37: #{tpu_custom_call.1} parent=1 // pred_fallthru
      _
    // Predicated region
    $region38: #{tpu_custom_call.1} parent=1 // pred_check
      _
    $region39: #{tpu_custom_call.1} parent=1 // pred_check_branch
      %140 = sbr.rel (0) target = $region41
    $region40: #{tpu_custom_call.1} parent=1 // pred_region
      %141 = dma.done [#allocation9], 256
    $region41: #{tpu_custom_call.1} parent=1 // pred_fallthru
      _
    // Predicated region
    $region42: #{tpu_custom_call.1} parent=1 // pred_check
      _
    $region43: #{tpu_custom_call.1} parent=1 // pred_check_branch
      %143 = sbr.rel (0) target = $region45
    $region44: #{tpu_custom_call.1} parent=1 // pred_region
      _
    $region45: #{tpu_custom_call.1} parent=1 // pred_fallthru
      _
    %144 = vsyncpa [#allocation3], 1
    %145 = vsyncpa [#allocation6], 1
    %146 = vsyncpa [#allocation4], 1
    %147 = vsyncpa [#allocation9], 1

</llo_original>
